<compile_context>
chip_gen: v5e
topology: v5e:2x2
jax: 0.10.0
libtpu: 0.0.40
codegen_flags: <defaults>
</compile_context>

<pallas_src>
import jax
import jax.numpy as jnp
from jax import lax
from jax.experimental import pallas as pl
from jax.experimental.pallas import tpu as pltpu

_EPS = 1e-5


# ----------------------------------------------------------------------------
# Kernel 1: gated score einsum + both max-poolings, one layer per grid step.
# ----------------------------------------------------------------------------
def pool_kernel(qproj_ref, kproj_ref, gqm_ref, gkm_ref, fa_ref, fb_ref):
    # qproj_ref: [1, Q*S, D] bf16   fc1(tgt), rows (q, t)
    # kproj_ref: [1, K*S, D] bf16   fc1(mem), rows (k, s)
    # gqm_ref:   [1, S, K*S] f32    gate[s, t] laid out as [t, k*S + s]
    # gkm_ref:   [1, S, Q*S] f32    gate[s, t] laid out as [s, q*S + t]
    # fa_ref:    [1, K, Q*S] bf16   max over s  -> indexed [k, (q, t)]
    # fb_ref:    [1, Q, K*S] bf16   max over t  -> indexed [q, (k, s)]
    _, QS, _ = qproj_ref.shape
    _, KS, _ = kproj_ref.shape
    _, S, _ = gqm_ref.shape
    Q = QS // S
    K = KS // S

    q2 = qproj_ref[0]                         # [Q*S, D]
    k2 = kproj_ref[0]                         # [K*S, D]
    dn = (((1,), (1,)), ((), ()))             # contract the D dim of both

    # score[q,k,s,t] = <fc1(tgt)[q,t], fc1(mem)[k,s]> * sigmoid(score_embed)[s,t]
    # Computed in BOTH row orientations so each max pool is a single axis-1
    # reduction over a lane-dense [*, S, 128·m] slab (no narrow slices, no
    # in-kernel transpose).  The second MXU call is negligible at D=32.
    rawQ = lax.dot_general(q2, k2, dn, preferred_element_type=jnp.float32)  # [(q,t),(k,s)]
    rawK = lax.dot_general(k2, q2, dn, preferred_element_type=jnp.float32)  # [(k,s),(q,t)]

    scoredQ = rawQ.reshape(Q, S, KS) * gqm_ref[0][None]   # [q, t, (k,s)]
    scoredK = rawK.reshape(K, S, QS) * gkm_ref[0][None]   # [k, s, (q,t)]

    # max over t (reference score.max(dim=2)) -> indexed by s, q-major rows.
    fb_ref[0] = jnp.max(scoredQ, axis=1).astype(fb_ref.dtype)   # [Q, K*S]
    # max over s (reference score.max(dim=1)) -> indexed by t, k-major rows.
    fa_ref[0] = jnp.max(scoredK, axis=1).astype(fa_ref.dtype)   # [K, Q*S]


# ----------------------------------------------------------------------------
# Kernel 2: bn1 -> fc2 -> bn2 -> relu -> fc3 -> pair-sum -> bn3, per layer.
# ----------------------------------------------------------------------------
def head_kernel(fa_ref, fb_ref, w2_ref, b2_ref, w3_ref, b3_ref, out_ref):
    # fa_ref / fb_ref: [1, QK, S] bf16 (q-major (q,k) rows; A indexed by t, B by s)
    # w2_ref: [1, S, F], b2_ref: [1, 1, F], w3_ref: [1, 1, F], b3_ref: [1, 1, 1]
    # out_ref: [1, 1, QK] f32 — this layer's bn3-normalized scores.
    _, QK, S = fa_ref.shape
    fa = fa_ref[0].astype(jnp.float32)
    fb = fb_ref[0].astype(jnp.float32)

    # bn1: BatchNorm1d(1) over the interleaved [2*QK, 1, S] tensor -> joint
    # stats over every element of both paths (centered, biased variance).
    cnt1 = float(2 * QK * S)
    m1 = (jnp.sum(fa) + jnp.sum(fb)) / cnt1
    da = fa - m1
    db = fb - m1
    v1 = (jnp.sum(da * da) + jnp.sum(db * db)) / cnt1
    inv1 = lax.rsqrt(v1 + _EPS)
    xa = da * inv1
    xb = db * inv1

    # fc2 (shared weights on both paths).
    w2 = w2_ref[0]
    b2 = b2_ref[0]
    ya = jnp.dot(xa, w2, preferred_element_type=jnp.float32) + b2    # [QK, F]
    yb = jnp.dot(xb, w2, preferred_element_type=jnp.float32) + b2    # [QK, F]

    # bn2: per-feature stats over the 2*QK rows (joint over both paths), relu.
    cnt2 = float(2 * QK)
    m2 = (jnp.sum(ya, axis=0, keepdims=True) +
          jnp.sum(yb, axis=0, keepdims=True)) / cnt2
    ca = ya - m2
    cb = yb - m2
    v2 = (jnp.sum(ca * ca, axis=0, keepdims=True) +
          jnp.sum(cb * cb, axis=0, keepdims=True)) / cnt2
    inv2 = lax.rsqrt(v2 + _EPS)
    za = jnp.maximum(ca * inv2, 0.0)
    zb = jnp.maximum(cb * inv2, 0.0)

    # fc3 on both paths + pair-sum (score.view(-1, 2).sum(-1)), fused via
    # linearity: fc3(zA_i) + fc3(zB_i) = w3 · (zA_i + zB_i) + 2*b3.
    zsum = za + zb                                                   # [QK, F]
    pair = lax.dot_general(w3_ref[0], zsum, (((1,), (1,)), ((), ())),
                           preferred_element_type=jnp.float32)       # [1, QK]
    pair = pair + 2.0 * b3_ref[0]

    # bn3 over the QK pair scores.
    m3 = jnp.sum(pair) / float(QK)
    pc = pair - m3
    v3 = jnp.sum(pc * pc) / float(QK)
    out_ref[0] = pc * lax.rsqrt(v3 + _EPS)


# ----------------------------------------------------------------------------
# Kernel 3: sum over layers + final decoder BatchNorm1d(1).
# ----------------------------------------------------------------------------
def finalize_kernel(scores_ref, out_ref):
    # scores_ref: [n, 1, QK] f32, out_ref: [1, QK] f32
    acc = jnp.sum(scores_ref[...], axis=0)          # [1, QK]
    qk = acc.shape[-1]
    m = jnp.sum(acc) / float(qk)
    c = acc - m
    v = jnp.sum(c * c) / float(qk)
    out_ref[...] = c * lax.rsqrt(v + _EPS)


# ----------------------------------------------------------------------------
# Wrapper
# ----------------------------------------------------------------------------
def transmatcher_forward(memory_feats, probe_feats, params,
                         *, num_layers, d_model, dim_feedforward):
    Q, H, W, Dtot = memory_feats.shape
    K = probe_feats.shape[0]
    S = H * W
    D = d_model
    n = num_layers
    F = dim_feedforward
    QK = Q * K
    assert Dtot == n * D

    # ---- fc1 on both sides, once per layer, as a plain XLA einsum (no tiny
    #      per-tile matmul kernel, no separate transpose pass over HBM).
    tgt4 = memory_feats.reshape(Q, S, n, D)    # chunk(dim=-1) -> per-layer slices
    mem4 = probe_feats.reshape(K, S, n, D)
    w1, b1 = params["w1"], params["b1"]
    qproj = jnp.einsum("qsld,lde->lqse", tgt4, w1) + b1[:, None, None, :]
    kproj = jnp.einsum("ksld,lde->lkse", mem4, w1) + b1[:, None, None, :]
    qproj = qproj.reshape(n, Q * S, D).astype(jnp.bfloat16)   # rows (q, t)
    kproj = kproj.reshape(n, K * S, D).astype(jnp.bfloat16)   # rows (k, s)

    # gate = sigmoid(score_embed), pre-tiled once per layer for each of the two
    # row orientations used in the pool kernel.
    gate = jax.nn.sigmoid(params["emb"])                      # [n, S, S], gate[l, s, t]
    gqm = jnp.tile(jnp.swapaxes(gate, 1, 2), (1, 1, K))       # [n, S, K*S]: [t, k*S+s]
    gkm = jnp.tile(gate, (1, 1, Q))                           # [n, S, Q*S]: [s, q*S+t]

    # ---- pool: one layer per grid step, lane-dense bf16 outputs.
    # TODO(synk): at real gallery/probe scale the [Q*S, K*S] score slab no
    # longer fits VMEM; this kernel then needs Q/K tiling (lane widths a
    # multiple of 256 on v6e/v7x) plus a streamed/two-pass BN head fused in so
    # the pooled features never round-trip through HBM.
    featA, featB = pl.pallas_call(
        pool_kernel,
        out_shape=(jax.ShapeDtypeStruct((n, K, Q * S), jnp.bfloat16),
                   jax.ShapeDtypeStruct((n, Q, K * S), jnp.bfloat16)),
        grid=(n,),
        in_specs=[
            pl.BlockSpec((1, Q * S, D), lambda l: (l, 0, 0)),
            pl.BlockSpec((1, K * S, D), lambda l: (l, 0, 0)),
            pl.BlockSpec((1, S, K * S), lambda l: (l, 0, 0)),
            pl.BlockSpec((1, S, Q * S), lambda l: (l, 0, 0)),
        ],
        out_specs=(pl.BlockSpec((1, K, Q * S), lambda l: (l, 0, 0)),
                   pl.BlockSpec((1, Q, K * S), lambda l: (l, 0, 0))),
        compiler_params=pltpu.CompilerParams(dimension_semantics=("parallel",)),
    )(qproj, kproj, gqm, gkm)

    # Realign featA rows from k-major to q-major in plain XLA (tiny tensor
    # here); featB is already q-major.  Both become [n, QK, S] with row q*K+k.
    featA_rows = featA.reshape(n, K, Q, S).transpose(0, 2, 1, 3).reshape(n, QK, S)
    featB_rows = featB.reshape(n, QK, S)

    # ---- per-layer head (parallel over layers -> megacore shardable).
    w2, b2, w3, b3 = params["w2"], params["b2"], params["w3"], params["b3"]
    layer_scores = pl.pallas_call(
        head_kernel,
        out_shape=jax.ShapeDtypeStruct((n, 1, QK), jnp.float32),
        grid=(n,),
        in_specs=[
            pl.BlockSpec((1, QK, S), lambda l: (l, 0, 0)),
            pl.BlockSpec((1, QK, S), lambda l: (l, 0, 0)),
            pl.BlockSpec((1, S, F), lambda l: (l, 0, 0)),
            pl.BlockSpec((1, 1, F), lambda l: (l, 0, 0)),
            pl.BlockSpec((1, 1, F), lambda l: (l, 0, 0)),
            pl.BlockSpec((1, 1, 1), lambda l: (l, 0, 0)),
        ],
        out_specs=pl.BlockSpec((1, 1, QK), lambda l: (l, 0, 0)),
        compiler_params=pltpu.CompilerParams(dimension_semantics=("parallel",)),
    )(featA_rows, featB_rows, w2, b2, w3, b3)

    # ---- sum over layers + final decoder BatchNorm1d(1).
    score = pl.pallas_call(
        finalize_kernel,
        out_shape=jax.ShapeDtypeStruct((1, QK), jnp.float32),
        grid=(1,),
        in_specs=[pl.BlockSpec((n, 1, QK), lambda i: (0, 0, 0))],
        out_specs=pl.BlockSpec((1, QK), lambda i: (0, 0)),
        compiler_params=pltpu.CompilerParams(dimension_semantics=("arbitrary",)),
    )(layer_scores)

    return score.reshape(Q, K)    # q-major (q, k), matching score.view(q, k)


def init_params(key, *, num_layers, seq_len, d_model, dim_feedforward):
    # Deterministic synthetic init mirroring TransMatcher parameter shapes.
    # Weight matrices (dim>1) get xavier_uniform (as in reset_parameters);
    # linear biases get the PyTorch-default uniform(+-1/sqrt(fan_in)).
    n, S, D, F = num_layers, seq_len, d_model, dim_feedforward
    ks = jax.random.split(key, 7)

    def xavier(k, shape, fan_in, fan_out):
        a = (6.0 / (fan_in + fan_out)) ** 0.5
        return jax.random.uniform(k, shape, jnp.float32, -a, a)

    def bias(k, shape, fan_in):
        a = 1.0 / (fan_in ** 0.5)
        return jax.random.uniform(k, shape, jnp.float32, -a, a)

    return {
        "w1": xavier(ks[0], (n, D, D), D, D),            # fc1 weight, pre-transposed (x @ w1)
        "b1": bias(ks[1], (n, D), D),
        "emb": xavier(ks[2], (n, S, S), S * S, S * S),   # score_embed (xavier'd by reset_parameters)
        "w2": xavier(ks[3], (n, S, F), S, F),            # fc2 weight, pre-transposed
        "b2": bias(ks[4], (n, 1, F), S),
        "w3": xavier(ks[5], (n, 1, F), F, 1),            # fc3 weight row
        "b3": bias(ks[6], (n, 1, 1), F),
    }
    # TODO(synk): BatchNorm running_mean/var updates are a training-time side
    # effect and are not modeled; forward uses batch statistics (PyTorch
    # training-mode default).


if __name__ == "__main__":
    num_layers = 3
    d_model = 32
    dim_feedforward = 64
    H = Wd = 4
    seq_len = H * Wd
    Q = 8   # gallery size (self.memory, set via make_kernel)
    K = 8   # probe batch size (features passed to forward)

    root = jax.random.PRNGKey(0)
    k_par, k_mem, k_feat = jax.random.split(root, 3)
    params = init_params(k_par, num_layers=num_layers, seq_len=seq_len,
                         d_model=d_model, dim_feedforward=dim_feedforward)

    memory_feats = jax.random.normal(k_mem, (Q, H, Wd, d_model * num_layers), jnp.float32)
    probe_feats = jax.random.normal(k_feat, (K, H, Wd, d_model * num_layers), jnp.float32)

    score = transmatcher_forward(memory_feats, probe_feats, params,
                                 num_layers=num_layers, d_model=d_model,
                                 dim_feedforward=dim_feedforward)
    score = jax.block_until_ready(score)
    assert score.shape == (Q, K)
    assert bool(jnp.all(jnp.isfinite(score)))
    print("KERNEL_OK")
</pallas_src>

<mosaic_0001>
module attributes {stable_mosaic.version = 11 : i64} {
  func.func @pool_kernel(%arg0: i32, %arg1: memref<1x128x32xbf16, #tpu.memory_space<vmem>>, %arg2: memref<1x128x32xbf16, #tpu.memory_space<vmem>>, %arg3: memref<1x16x128xf32, #tpu.memory_space<vmem>>, %arg4: memref<1x16x128xf32, #tpu.memory_space<vmem>>, %arg5: memref<1x8x128xbf16, #tpu.memory_space<vmem>>, %arg6: memref<1x8x128xbf16, #tpu.memory_space<vmem>>) attributes {dimension_semantics = [#tpu.dimension_semantics<parallel>], iteration_bounds = array<i64: 3>, scalar_prefetch = 0 : i64, scratch_operands = 0 : i64, tpu.core_type = #tpu.core_type<tc>, window_params = [{transform_indices = @transform_0, window_bounds = array<i64: 1, 128, 32>}, {transform_indices = @transform_1, window_bounds = array<i64: 1, 128, 32>}, {transform_indices = @transform_2, window_bounds = array<i64: 1, 16, 128>}, {transform_indices = @transform_3, window_bounds = array<i64: 1, 16, 128>}, {transform_indices = @transform_4, window_bounds = array<i64: 1, 8, 128>}, {transform_indices = @transform_5, window_bounds = array<i64: 1, 8, 128>}]} {
    %c0 = arith.constant 0 : index
    %c0_0 = arith.constant 0 : index
    %c0_1 = arith.constant 0 : index
    %0 = vector.load %arg1[%c0, %c0_0, %c0_1] : memref<1x128x32xbf16, #tpu.memory_space<vmem>>, vector<1x128x32xbf16>
    %1 = vector.shape_cast %0 : vector<1x128x32xbf16> to vector<128x32xbf16>
    %c0_2 = arith.constant 0 : index
    %c0_3 = arith.constant 0 : index
    %c0_4 = arith.constant 0 : index
    %2 = vector.load %arg2[%c0_2, %c0_3, %c0_4] : memref<1x128x32xbf16, #tpu.memory_space<vmem>>, vector<1x128x32xbf16>
    %3 = vector.shape_cast %2 : vector<1x128x32xbf16> to vector<128x32xbf16>
    %cst = arith.constant dense<0.000000e+00> : vector<128x128xf32>
    %4 = tpu.matmul %1, %3, %cst {dimension_numbers = #tpu.dot_dimension_numbers<[1], [1], [0], [0], [0, 0, 1, 0], [], []>} : vector<128x32xbf16>, vector<128x32xbf16>, vector<128x128xf32> -> vector<128x128xf32>
    %cst_5 = arith.constant dense<0.000000e+00> : vector<128x128xf32>
    %5 = tpu.matmul %3, %1, %cst_5 {dimension_numbers = #tpu.dot_dimension_numbers<[1], [1], [0], [0], [0, 0, 1, 0], [], []>} : vector<128x32xbf16>, vector<128x32xbf16>, vector<128x128xf32> -> vector<128x128xf32>
    %6 = vector.shape_cast %4 : vector<128x128xf32> to vector<8x16x128xf32>
    %c0_6 = arith.constant 0 : index
    %c0_7 = arith.constant 0 : index
    %c0_8 = arith.constant 0 : index
    %7 = vector.load %arg3[%c0_6, %c0_7, %c0_8] : memref<1x16x128xf32, #tpu.memory_space<vmem>>, vector<1x16x128xf32>
    %8 = vector.shape_cast %7 : vector<1x16x128xf32> to vector<16x128xf32>
    %9 = vector.shape_cast %8 : vector<16x128xf32> to vector<1x16x128xf32>
    %10 = vector.broadcast %9 : vector<1x16x128xf32> to vector<8x16x128xf32>
    %11 = arith.mulf %6, %10 : vector<8x16x128xf32>
    %12 = vector.shape_cast %5 : vector<128x128xf32> to vector<8x16x128xf32>
    %c0_9 = arith.constant 0 : index
    %c0_10 = arith.constant 0 : index
    %c0_11 = arith.constant 0 : index
    %13 = vector.load %arg4[%c0_9, %c0_10, %c0_11] : memref<1x16x128xf32, #tpu.memory_space<vmem>>, vector<1x16x128xf32>
    %14 = vector.shape_cast %13 : vector<1x16x128xf32> to vector<16x128xf32>
    %15 = vector.shape_cast %14 : vector<16x128xf32> to vector<1x16x128xf32>
    %16 = vector.broadcast %15 : vector<1x16x128xf32> to vector<8x16x128xf32>
    %17 = arith.mulf %12, %16 : vector<8x16x128xf32>
    %cst_12 = arith.constant dense<0xFF800000> : vector<8x128xf32>
    %18 = vector.multi_reduction <maximumf>, %11, %cst_12 [1] : vector<8x16x128xf32> to vector<8x128xf32>
    %19 = arith.truncf %18 : vector<8x128xf32> to vector<8x128xbf16>
    %c0_13 = arith.constant 0 : index
    %c0_14 = arith.constant 0 : index
    %c0_15 = arith.constant 0 : index
    %20 = vector.load %arg6[%c0_13, %c0_14, %c0_15] : memref<1x8x128xbf16, #tpu.memory_space<vmem>>, vector<1x8x128xbf16>
    %21 = vector.shape_cast %20 : vector<1x8x128xbf16> to vector<8x128xbf16>
    %22 = vector.shape_cast %19 : vector<8x128xbf16> to vector<1x8x128xbf16>
    tpu.vector_store %arg6[%c0_13, %c0_14, %c0_15], %22 {strides = array<i32>} : memref<1x8x128xbf16, #tpu.memory_space<vmem>>, vector<1x8x128xbf16>,
    %cst_16 = arith.constant dense<0xFF800000> : vector<8x128xf32>
    %23 = vector.multi_reduction <maximumf>, %17, %cst_16 [1] : vector<8x16x128xf32> to vector<8x128xf32>
    %24 = arith.truncf %23 : vector<8x128xf32> to vector<8x128xbf16>
    %c0_17 = arith.constant 0 : index
    %c0_18 = arith.constant 0 : index
    %c0_19 = arith.constant 0 : index
    %25 = vector.load %arg5[%c0_17, %c0_18, %c0_19] : memref<1x8x128xbf16, #tpu.memory_space<vmem>>, vector<1x8x128xbf16>
    %26 = vector.shape_cast %25 : vector<1x8x128xbf16> to vector<8x128xbf16>
    %27 = vector.shape_cast %24 : vector<8x128xbf16> to vector<1x8x128xbf16>
    tpu.vector_store %arg5[%c0_17, %c0_18, %c0_19], %27 {strides = array<i32>} : memref<1x8x128xbf16, #tpu.memory_space<vmem>>, vector<1x8x128xbf16>,
    return
  }
  func.func @transform_0(%arg0: i32) -> (i32, i32, i32) {
    %c0_i32 = arith.constant 0 : i32
    %c0_i32_0 = arith.constant 0 : i32
    %c0_i32_1 = arith.constant 0 : i32
    return %arg0, %c0_i32, %c0_i32_0 : i32, i32, i32
  }
  func.func @transform_1(%arg0: i32) -> (i32, i32, i32) {
    %c0_i32 = arith.constant 0 : i32
    %c0_i32_0 = arith.constant 0 : i32
    %c0_i32_1 = arith.constant 0 : i32
    return %arg0, %c0_i32, %c0_i32_0 : i32, i32, i32
  }
  func.func @transform_2(%arg0: i32) -> (i32, i32, i32) {
    %c0_i32 = arith.constant 0 : i32
    %c0_i32_0 = arith.constant 0 : i32
    %c0_i32_1 = arith.constant 0 : i32
    return %arg0, %c0_i32, %c0_i32_0 : i32, i32, i32
  }
  func.func @transform_3(%arg0: i32) -> (i32, i32, i32) {
    %c0_i32 = arith.constant 0 : i32
    %c0_i32_0 = arith.constant 0 : i32
    %c0_i32_1 = arith.constant 0 : i32
    return %arg0, %c0_i32, %c0_i32_0 : i32, i32, i32
  }
  func.func @transform_4(%arg0: i32) -> (i32, i32, i32) {
    %c0_i32 = arith.constant 0 : i32
    %c0_i32_0 = arith.constant 0 : i32
    %c0_i32_1 = arith.constant 0 : i32
    return %arg0, %c0_i32, %c0_i32_0 : i32, i32, i32
  }
  func.func @transform_5(%arg0: i32) -> (i32, i32, i32) {
    %c0_i32 = arith.constant 0 : i32
    %c0_i32_0 = arith.constant 0 : i32
    %c0_i32_1 = arith.constant 0 : i32
    return %arg0, %c0_i32, %c0_i32_0 : i32, i32, i32
  }
}

</mosaic_0001>

<llo_original>
// kernel: tpu_custom_call.1
$region0: #{tpu_custom_call.1}
  #allocation0 [shape = 'u32[]', space=smem, size = 0x4, offset = 0x4, fixed_abs, tag = 'smem constant byte address 0x4 - core index']
  #allocation1 [shape = 'u32[72,128]{1,0:T(1,128)}', space=vmem, size = 0x9000, scoped, tag = 'internal scratch']
  %s0 = inlined_call_operand.vmem [shape: bf16[3,128,32], index: 0, kind: input, shape index: {}]
  %s1 = inlined_call_operand.vmem [shape: bf16[3,128,32], index: 1, kind: input, shape index: {}]
  %s2 = inlined_call_operand.vmem [shape: f32[3,16,128], index: 2, kind: input, shape index: {}]
  %s3 = inlined_call_operand.vmem [shape: f32[3,16,128], index: 3, kind: input, shape index: {}]
  %s4 = inlined_call_operand.hbm [shape: bf16[3,8,128], index: 4, kind: output, shape index: {0}]
  %s5 = inlined_call_operand.hbm [shape: bf16[3,8,128], index: 5, kind: output, shape index: {1}]
  %6 = xla_tuple %s4, %s5
  %s7 = sld [smem:[#allocation0]]
  $region57: #{tpu_custom_call.1} parent=0
    _
  %s9 = ssub.s32 1, %s7
  %s10 = scalar_select 0, %s9, %s7
  $region1: #{tpu_custom_call.1} parent=0
    #allocation2 [shape = 'u8[4096]{0}', space=vmem, size = 0x1000, scoped, tag = 'output window, operand 0']
    #allocation3 [shape = 's32[2]{0}', space=sflag, size = 0x8, scoped, tag = 'scoped memory for tpu_custom_call.1']
    #allocation4 [shape = 'u8[4096]{0}', space=vmem, size = 0x1000, scoped, tag = 'output window, operand 1']
    #allocation5 [shape = 's32[2]{0}', space=sflag, size = 0x8, scoped, tag = 'scoped memory for tpu_custom_call.1']
    %11 = vsyncpa [#allocation3], 0
    %s12 = scalar_lea.sflag [#allocation3], 1
    %13 = vsyncpa %s12, 0
    %14 = vsyncpa [#allocation5], 0
    %s15 = scalar_lea.sflag [#allocation5], 1
    %16 = vsyncpa %s15, 0
    loop: start=0, step=1, limit=5
    $region2: #{tpu_custom_call.1} parent=1 // loop_pre_header
      _
    $region3: #{tpu_custom_call.1} parent=1 // loop_header
      %s18 = sphi 0, %s22
      %p19 = scmp.ge.s32.totalorder %s18, 5
      %s28 = sphi 0, %s30
      %s31 = sphi 0, %s28
      %s32 = sphi 0, %s31
      %s48 = sphi 0, %s32
      %s54 = sphi 0, %s56
      %s57 = sphi 0, %s54
      %s58 = sphi 0, %s57
      %s74 = sphi 0, %s58
      %s80 = sphi 0, %s82
      %s83 = sphi 0, %s80
      %s84 = sphi 0, %s83
      %s100 = sphi 0, %s84
      %s106 = sphi 0, %s108
      %s109 = sphi 0, %s106
      %s110 = sphi 0, %s109
      %s126 = sphi 0, %s110
      %s132 = sphi 0, %s134
      %s135 = sphi 0, %s132
      %s136 = sphi 0, %s135
      %s152 = sphi 0, %s136
      %s158 = sphi 0, %s160
      %s161 = sphi 0, %s158
      %s162 = sphi 0, %s161
      %s178 = sphi 0, %s162
    $region4: #{tpu_custom_call.1} parent=1 // loop_header_branch
      %21 = sbr.rel (%p19) target = $region8
    $region5: #{tpu_custom_call.1} parent=1 // loop_body
      %s23 = ssub.s32 %s18, 1
      %s24 = ssub.s32 %s18, 2
      %s25 = sadd.s32 %s18, 1
      %s26 = ssub.s32 %s18, %s25
      %p27 = scmp.eq.s32.totalorder %s26, 0
      %s29 = sadd.s32 %s28, 1
      %s30 = scalar_select %p27, %s28, %s29
      %p33 = pneg %p27
      %p34 = scmp.eq.s32.totalorder %s18, 2
      %p35 = por %p33, %p34
      %p36 = scmp.ne.s32.totalorder %s28, %s31
      %p37 = scmp.eq.s32.totalorder %s18, 0
      %p38 = por %p36, %p37
      %p39 = scmp.ne.s32.totalorder %s28, %s31
      %p40 = scmp.eq.s32.totalorder %s23, 2
      %p41 = por %p39, %p40
      %p42 = scmp.ne.s32.totalorder %s31, %s32
      %p43 = scmp.eq.s32.totalorder %s23, 0
      %p44 = por %p42, %p43
      %p45 = scmp.ne.s32.totalorder %s31, %s32
      %p46 = scmp.eq.s32.totalorder %s24, 2
      %p47 = por %p45, %p46
      %p49 = scmp.ne.s32.totalorder %s32, %s48
      %p50 = scmp.eq.s32.totalorder %s24, 0
      %p51 = por %p49, %p50
      %s52 = ssub.s32 %s18, %s25
      %p53 = scmp.eq.s32.totalorder %s52, 0
      %s55 = sadd.s32 %s54, 1
      %s56 = scalar_select %p53, %s54, %s55
      %p59 = pneg %p53
      %p60 = scmp.eq.s32.totalorder %s18, 2
      %p61 = por %p59, %p60
      %p62 = scmp.ne.s32.totalorder %s54, %s57
      %p63 = scmp.eq.s32.totalorder %s18, 0
      %p64 = por %p62, %p63
      %p65 = scmp.ne.s32.totalorder %s54, %s57
      %p66 = scmp.eq.s32.totalorder %s23, 2
      %p67 = por %p65, %p66
      %p68 = scmp.ne.s32.totalorder %s57, %s58
      %p69 = scmp.eq.s32.totalorder %s23, 0
      %p70 = por %p68, %p69
      %p71 = scmp.ne.s32.totalorder %s57, %s58
      %p72 = scmp.eq.s32.totalorder %s24, 2
      %p73 = por %p71, %p72
      %p75 = scmp.ne.s32.totalorder %s58, %s74
      %p76 = scmp.eq.s32.totalorder %s24, 0
      %p77 = por %p75, %p76
      %s78 = ssub.s32 %s18, %s25
      %p79 = scmp.eq.s32.totalorder %s78, 0
      %s81 = sadd.s32 %s80, 1
      %s82 = scalar_select %p79, %s80, %s81
      %p85 = pneg %p79
      %p86 = scmp.eq.s32.totalorder %s18, 2
      %p87 = por %p85, %p86
      %p88 = scmp.ne.s32.totalorder %s80, %s83
      %p89 = scmp.eq.s32.totalorder %s18, 0
      %p90 = por %p88, %p89
      %p91 = scmp.ne.s32.totalorder %s80, %s83
      %p92 = scmp.eq.s32.totalorder %s23, 2
      %p93 = por %p91, %p92
      %p94 = scmp.ne.s32.totalorder %s83, %s84
      %p95 = scmp.eq.s32.totalorder %s23, 0
      %p96 = por %p94, %p95
      %p97 = scmp.ne.s32.totalorder %s83, %s84
      %p98 = scmp.eq.s32.totalorder %s24, 2
      %p99 = por %p97, %p98
      %p101 = scmp.ne.s32.totalorder %s84, %s100
      %p102 = scmp.eq.s32.totalorder %s24, 0
      %p103 = por %p101, %p102
      %s104 = ssub.s32 %s18, %s25
      %p105 = scmp.eq.s32.totalorder %s104, 0
      %s107 = sadd.s32 %s106, 1
      %s108 = scalar_select %p105, %s106, %s107
      %p111 = pneg %p105
      %p112 = scmp.eq.s32.totalorder %s18, 2
      %p113 = por %p111, %p112
      %p114 = scmp.ne.s32.totalorder %s106, %s109
      %p115 = scmp.eq.s32.totalorder %s18, 0
      %p116 = por %p114, %p115
      %p117 = scmp.ne.s32.totalorder %s106, %s109
      %p118 = scmp.eq.s32.totalorder %s23, 2
      %p119 = por %p117, %p118
      %p120 = scmp.ne.s32.totalorder %s109, %s110
      %p121 = scmp.eq.s32.totalorder %s23, 0
      %p122 = por %p120, %p121
      %p123 = scmp.ne.s32.totalorder %s109, %s110
      %p124 = scmp.eq.s32.totalorder %s24, 2
      %p125 = por %p123, %p124
      %p127 = scmp.ne.s32.totalorder %s110, %s126
      %p128 = scmp.eq.s32.totalorder %s24, 0
      %p129 = por %p127, %p128
      %s130 = ssub.s32 %s18, %s25
      %p131 = scmp.eq.s32.totalorder %s130, 0
      %s133 = sadd.s32 %s132, 1
      %s134 = scalar_select %p131, %s132, %s133
      %p137 = pneg %p131
      %p138 = scmp.eq.s32.totalorder %s18, 2
      %p139 = por %p137, %p138
      %p140 = scmp.ne.s32.totalorder %s132, %s135
      %p141 = scmp.eq.s32.totalorder %s18, 0
      %p142 = por %p140, %p141
      %p143 = scmp.ne.s32.totalorder %s132, %s135
      %p144 = scmp.eq.s32.totalorder %s23, 2
      %p145 = por %p143, %p144
      %p146 = scmp.ne.s32.totalorder %s135, %s136
      %p147 = scmp.eq.s32.totalorder %s23, 0
      %p148 = por %p146, %p147
      %p149 = scmp.ne.s32.totalorder %s135, %s136
      %p150 = scmp.eq.s32.totalorder %s24, 2
      %p151 = por %p149, %p150
      %p153 = scmp.ne.s32.totalorder %s136, %s152
      %p154 = scmp.eq.s32.totalorder %s24, 0
      %p155 = por %p153, %p154
      %s156 = ssub.s32 %s18, %s25
      %p157 = scmp.eq.s32.totalorder %s156, 0
      %s159 = sadd.s32 %s158, 1
      %s160 = scalar_select %p157, %s158, %s159
      %p163 = pneg %p157
      %p164 = scmp.eq.s32.totalorder %s18, 2
      %p165 = por %p163, %p164
      %p166 = scmp.ne.s32.totalorder %s158, %s161
      %p167 = scmp.eq.s32.totalorder %s18, 0
      %p168 = por %p166, %p167
      %p169 = scmp.ne.s32.totalorder %s158, %s161
      %p170 = scmp.eq.s32.totalorder %s23, 2
      %p171 = por %p169, %p170
      %p172 = scmp.ne.s32.totalorder %s161, %s162
      %p173 = scmp.eq.s32.totalorder %s23, 0
      %p174 = por %p172, %p173
      %p175 = scmp.ne.s32.totalorder %s161, %s162
      %p176 = scmp.eq.s32.totalorder %s24, 2
      %p177 = por %p175, %p176
      %p179 = scmp.ne.s32.totalorder %s162, %s178
      %p180 = scmp.eq.s32.totalorder %s24, 0
      %p181 = por %p179, %p180
      %p182 = scmp.le.s32.totalorder 1, %s18
      %p183 = scmp.lt.s32.totalorder %s18, 4
      %p184 = pnand %p182, %p183
      %p185 = pneg %p184
      // Predicated region
      $region9: #{tpu_custom_call.1} parent=5 // pred_check
        _
      $region10: #{tpu_custom_call.1} parent=5 // pred_check_branch
        %187 = sbr.rel (%p184) target = $region12
      $region11: #{tpu_custom_call.1} parent=5 // pred_region
        %s188 = ssub.s32 %s18, 1
      $region12: #{tpu_custom_call.1} parent=5 // pred_fallthru
        _
      %p189 = scmp.lt.s32.totalorder %s18, 3
      // Predicated region
      $region13: #{tpu_custom_call.1} parent=5 // pred_check
        %p190 = pneg %p189
      $region14: #{tpu_custom_call.1} parent=5 // pred_check_branch
        %192 = sbr.rel (%p190) target = $region16
      $region15: #{tpu_custom_call.1} parent=5 // pred_region
        // Predicated region
        $region17: #{tpu_custom_call.1} parent=15 // pred_check
          %p193 = pneg %p38
        $region18: #{tpu_custom_call.1} parent=15 // pred_check_branch
          %195 = sbr.rel (%p193) target = $region20
        $region19: #{tpu_custom_call.1} parent=15 // pred_region
          %p196 = scmp.lt.s32.totalorder %s18, 2
          %s197 = scalar_select %p196, %s18, 2
          %s198 = smul.addr %s197, 16
          %s199 = smul.addr %s198, 4
          %s200 = scalar_lea.vmem %s0, %s199
        $region20: #{tpu_custom_call.1} parent=15 // pred_fallthru
          _
        // Predicated region
        $region21: #{tpu_custom_call.1} parent=15 // pred_check
          %p201 = pneg %p64
        $region22: #{tpu_custom_call.1} parent=15 // pred_check_branch
          %203 = sbr.rel (%p201) target = $region24
        $region23: #{tpu_custom_call.1} parent=15 // pred_region
          %p204 = scmp.lt.s32.totalorder %s18, 2
          %s205 = scalar_select %p204, %s18, 2
          %s206 = smul.addr %s205, 16
          %s207 = smul.addr %s206, 4
          %s208 = scalar_lea.vmem %s1, %s207
        $region24: #{tpu_custom_call.1} parent=15 // pred_fallthru
          _
        // Predicated region
        $region25: #{tpu_custom_call.1} parent=15 // pred_check
          %p209 = pneg %p90
        $region26: #{tpu_custom_call.1} parent=15 // pred_check_branch
          %211 = sbr.rel (%p209) target = $region28
        $region27: #{tpu_custom_call.1} parent=15 // pred_region
          %p212 = scmp.lt.s32.totalorder %s18, 2
          %s213 = scalar_select %p212, %s18, 2
          %s214 = smul.addr %s213, 2
          %s215 = smul.addr %s214, 8
          %s216 = scalar_lea.vmem %s2, %s215
        $region28: #{tpu_custom_call.1} parent=15 // pred_fallthru
          _
        // Predicated region
        $region29: #{tpu_custom_call.1} parent=15 // pred_check
          %p217 = pneg %p116
        $region30: #{tpu_custom_call.1} parent=15 // pred_check_branch
          %219 = sbr.rel (%p217) target = $region32
        $region31: #{tpu_custom_call.1} parent=15 // pred_region
          %p220 = scmp.lt.s32.totalorder %s18, 2
          %s221 = scalar_select %p220, %s18, 2
          %s222 = smul.addr %s221, 2
          %s223 = smul.addr %s222, 8
          %s224 = scalar_lea.vmem %s3, %s223
        $region32: #{tpu_custom_call.1} parent=15 // pred_fallthru
          _
      $region16: #{tpu_custom_call.1} parent=5 // pred_fallthru
        _
      %p225 = scmp.le.s32.totalorder 1, %s18
      %p226 = scmp.lt.s32.totalorder %s18, 4
      %p227 = pnand %p225, %p226
      %p228 = pneg %p227
      // Predicated region
      $region33: #{tpu_custom_call.1} parent=5 // pred_check
        _
      $region34: #{tpu_custom_call.1} parent=5 // pred_check_branch
        %230 = sbr.rel (%p227) target = $region36
      $region35: #{tpu_custom_call.1} parent=5 // pred_region
        %s231 = ssub.s32 %s18, 1
        %p232 = scmp.lt.s32.totalorder %s23, 2
        %s233 = scalar_select %p232, %s23, 2
        %s234 = smul.addr %s233, 16
        %s235 = smul.addr %s234, 4
        %s236 = scalar_lea.vmem %s0, %s235
        %p237 = pneg %p44
        %p238 = pneg %p41
        %p239 = scmp.lt.s32.totalorder %s23, 2
        %s240 = scalar_select %p239, %s23, 2
        %s241 = smul.addr %s240, 16
        %s242 = smul.addr %s241, 4
        %s243 = scalar_lea.vmem %s1, %s242
        %p244 = pneg %p70
        %p245 = pneg %p67
        %p246 = scmp.lt.s32.totalorder %s23, 2
        %s247 = scalar_select %p246, %s23, 2
        %s248 = smul.addr %s247, 2
        %s249 = smul.addr %s248, 8
        %s250 = scalar_lea.vmem %s2, %s249
        %p251 = pneg %p96
        %p252 = pneg %p93
        %p253 = scmp.lt.s32.totalorder %s23, 2
        %s254 = scalar_select %p253, %s23, 2
        %s255 = smul.addr %s254, 2
        %s256 = smul.addr %s255, 8
        %s257 = scalar_lea.vmem %s3, %s256
        %p258 = pneg %p122
        %p259 = pneg %p119
        %p260 = pneg %p148
        %p261 = pneg %p145
        %s262 = sand.u32 %s135, 1
        %s263 = scalar_lea.sflag [#allocation3], %s262
        %s264 = sand.u32 %s135, 1
        %s265 = smul.addr %s264, 4
        %s266 = scalar_lea.vmem [#allocation2], %s265
        %p267 = pneg %p174
        %p268 = pneg %p171
        %s269 = sand.u32 %s161, 1
        %s270 = scalar_lea.sflag [#allocation5], %s269
        %s271 = sand.u32 %s161, 1
        %s272 = smul.addr %s271, 4
        %s273 = scalar_lea.vmem [#allocation4], %s272
        %p274 = scmp.lt.s32.totalorder %s23, 2
        %s275 = scalar_select %p274, %s23, 2
        %s276 = smul.addr %s275, 16
        %s277 = smul.addr %s276, 4
        %s278 = scalar_lea.vmem %s0, %s277
        %p279 = scmp.lt.s32.totalorder %s23, 2
        %s280 = scalar_select %p279, %s23, 2
        %s281 = smul.addr %s280, 16
        %s282 = smul.addr %s281, 4
        %s283 = scalar_lea.vmem %s1, %s282
        %p284 = scmp.lt.s32.totalorder %s23, 2
        %s285 = scalar_select %p284, %s23, 2
        %s286 = smul.addr %s285, 2
        %s287 = smul.addr %s286, 8
        %s288 = scalar_lea.vmem %s2, %s287
        %p289 = scmp.lt.s32.totalorder %s23, 2
        %s290 = scalar_select %p289, %s23, 2
        %s291 = smul.addr %s290, 2
        %s292 = smul.addr %s291, 8
        %s293 = scalar_lea.vmem %s3, %s292
        %v294 = vld [vmem:[%s278] sm:$0xf]
        %v295 = vld [vmem:[%s278 + $0x4] sm:$0xf]
        %v296 = vld [vmem:[%s278 + $0x8] sm:$0xf]
        %v297 = vld [vmem:[%s278 + $0xc] sm:$0xf]
        %v298 = vld [vmem:[%s278 + $0x10] sm:$0xf]
        %v299 = vld [vmem:[%s278 + $0x14] sm:$0xf]
        %v300 = vld [vmem:[%s278 + $0x18] sm:$0xf]
        %v301 = vld [vmem:[%s278 + $0x1c] sm:$0xf]
        %v302 = vld [vmem:[%s278 + $0x20] sm:$0xf]
        %v303 = vld [vmem:[%s278 + $0x24] sm:$0xf]
        %v304 = vld [vmem:[%s278 + $0x28] sm:$0xf]
        %v305 = vld [vmem:[%s278 + $0x2c] sm:$0xf]
        %v306 = vld [vmem:[%s278 + $0x30] sm:$0xf]
        %v307 = vld [vmem:[%s278 + $0x34] sm:$0xf]
        %v308 = vld [vmem:[%s278 + $0x38] sm:$0xf]
        %v309 = vld [vmem:[%s278 + $0x3c] sm:$0xf]
        %v310 = vld [vmem:[%s283] sm:$0xf]
        %v311 = vld [vmem:[%s283 + $0x4] sm:$0xf]
        %v312 = vld [vmem:[%s283 + $0x8] sm:$0xf]
        %v313 = vld [vmem:[%s283 + $0xc] sm:$0xf]
        %v314 = vld [vmem:[%s283 + $0x10] sm:$0xf]
        %v315 = vld [vmem:[%s283 + $0x14] sm:$0xf]
        %v316 = vld [vmem:[%s283 + $0x18] sm:$0xf]
        %v317 = vld [vmem:[%s283 + $0x1c] sm:$0xf]
        %v318 = vld [vmem:[%s283 + $0x20] sm:$0xf]
        %v319 = vld [vmem:[%s283 + $0x24] sm:$0xf]
        %v320 = vld [vmem:[%s283 + $0x28] sm:$0xf]
        %v321 = vld [vmem:[%s283 + $0x2c] sm:$0xf]
        %v322 = vld [vmem:[%s283 + $0x30] sm:$0xf]
        %v323 = vld [vmem:[%s283 + $0x34] sm:$0xf]
        %v324 = vld [vmem:[%s283 + $0x38] sm:$0xf]
        %v325 = vld [vmem:[%s283 + $0x3c] sm:$0xf]
        %v342 = vunpack.c.l.b16 %v294
        %v343 = vunpack.c.l.b16 %v295
        %v344 = vunpack.c.l.b16 %v296
        %v345 = vunpack.c.l.b16 %v297
        %v346 = vunpack.c.l.b16 %v298
        %v347 = vunpack.c.l.b16 %v299
        %v348 = vunpack.c.l.b16 %v300
        %v349 = vunpack.c.l.b16 %v301
        %v350 = vunpack.c.l.b16 %v302
        %v351 = vunpack.c.l.b16 %v303
        %v352 = vunpack.c.l.b16 %v304
        %v353 = vunpack.c.l.b16 %v305
        %v354 = vunpack.c.l.b16 %v306
        %v355 = vunpack.c.l.b16 %v307
        %v356 = vunpack.c.l.b16 %v308
        %v357 = vunpack.c.l.b16 %v309
        %v358 = vpack.c.b16 %v343, %v342
        %v359 = vpack.c.b16 %v345, %v344
        %v360 = vpack.c.b16 %v347, %v346
        %v361 = vpack.c.b16 %v349, %v348
        %v362 = vpack.c.b16 %v351, %v350
        %v363 = vpack.c.b16 %v353, %v352
        %v364 = vpack.c.b16 %v355, %v354
        %v365 = vpack.c.b16 %v357, %v356
        %v382 = vunpack.c.l.b16 %v310
        %v383 = vunpack.c.l.b16 %v311
        %v384 = vunpack.c.l.b16 %v312
        %v385 = vunpack.c.l.b16 %v313
        %v386 = vunpack.c.l.b16 %v314
        %v387 = vunpack.c.l.b16 %v315
        %v388 = vunpack.c.l.b16 %v316
        %v389 = vunpack.c.l.b16 %v317
        %v390 = vunpack.c.l.b16 %v318
        %v391 = vunpack.c.l.b16 %v319
        %v392 = vunpack.c.l.b16 %v320
        %v393 = vunpack.c.l.b16 %v321
        %v394 = vunpack.c.l.b16 %v322
        %v395 = vunpack.c.l.b16 %v323
        %v396 = vunpack.c.l.b16 %v324
        %v397 = vunpack.c.l.b16 %v325
        %v398 = vpack.c.b16 %v383, %v382
        %v399 = vpack.c.b16 %v385, %v384
        %v400 = vpack.c.b16 %v387, %v386
        %v401 = vpack.c.b16 %v389, %v388
        %v402 = vpack.c.b16 %v391, %v390
        %v403 = vpack.c.b16 %v393, %v392
        %v404 = vpack.c.b16 %v395, %v394
        %v405 = vpack.c.b16 %v397, %v396
        %vm406 = vcmask 261120
        %v408 = vsel %vm406, %v358, 0
        %v411 = vsel %vm406, %v359, 0
        %v414 = vsel %vm406, %v360, 0
        %v417 = vsel %vm406, %v361, 0
        %v420 = vsel %vm406, %v362, 0
        %v423 = vsel %vm406, %v363, 0
        %v426 = vsel %vm406, %v364, 0
        %v429 = vsel %vm406, %v365, 0
        %v432 = vsel %vm406, %v398, 0
        %v435 = vsel %vm406, %v399, 0
        %v438 = vsel %vm406, %v400, 0
        %v441 = vsel %vm406, %v401, 0
        %v444 = vsel %vm406, %v402, 0
        %v447 = vsel %vm406, %v403, 0
        %v450 = vsel %vm406, %v404, 0
        %v453 = vsel %vm406, %v405, 0
        %455 = vmatpush.bf16.xpose.msra.mxu0 %v453
        %456 = vmatpush.bf16.xpose.msra.mxu0 %v450
        %457 = vmatpush.bf16.xpose.msra.mxu0 %v447
        %458 = vmatpush.bf16.xpose.msra.mxu0 %v444
        %459 = vmatpush.bf16.xpose.msra.mxu0 %v441
        %460 = vmatpush.bf16.xpose.msra.mxu0 %v438
        %461 = vmatpush.bf16.xpose.msra.mxu0 %v435
        %462 = vmatpush.bf16.xpose.msra.mxu0 %v432
        %463 = vmatmul.bf16.gmra.mxu0 %v408
        %v464 = vpop.f32.mrf.mxu0
        %v465 = vadd.f32 0.0, %v464
        %v466 = vpop.f32.mrf.mxu0
        %v467 = vadd.f32 0.0, %v466
        %468 = vmatmul.bf16.gmra.mxu0 %v411
        %v469 = vpop.f32.mrf.mxu0
        %v470 = vadd.f32 0.0, %v469
        %v471 = vpop.f32.mrf.mxu0
        %v472 = vadd.f32 0.0, %v471
        %473 = vmatmul.bf16.gmra.mxu0 %v414
        %v474 = vpop.f32.mrf.mxu0
        %v475 = vadd.f32 0.0, %v474
        %v476 = vpop.f32.mrf.mxu0
        %v477 = vadd.f32 0.0, %v476
        %478 = vmatmul.bf16.gmra.mxu0 %v417
        %v479 = vpop.f32.mrf.mxu0
        %v480 = vadd.f32 0.0, %v479
        %v481 = vpop.f32.mrf.mxu0
        %v482 = vadd.f32 0.0, %v481
        %483 = vmatmul.bf16.gmra.mxu0 %v420
        %v484 = vpop.f32.mrf.mxu0
        %v485 = vadd.f32 0.0, %v484
        %v486 = vpop.f32.mrf.mxu0
        %v487 = vadd.f32 0.0, %v486
        %488 = vmatmul.bf16.gmra.mxu0 %v423
        %v489 = vpop.f32.mrf.mxu0
        %v490 = vadd.f32 0.0, %v489
        %v491 = vpop.f32.mrf.mxu0
        %v492 = vadd.f32 0.0, %v491
        %493 = vmatmul.bf16.gmra.mxu0 %v426
        %v494 = vpop.f32.mrf.mxu0
        %v495 = vadd.f32 0.0, %v494
        %v496 = vpop.f32.mrf.mxu0
        %v497 = vadd.f32 0.0, %v496
        %498 = vmatmul.bf16.gmra.mxu0 %v429
        %v499 = vpop.f32.mrf.mxu0
        %v500 = vadd.f32 0.0, %v499
        %v501 = vpop.f32.mrf.mxu0
        %v502 = vadd.f32 0.0, %v501
        %503 = vdwg.mxu0
        %504 = vmatpush.bf16.xpose.msra.mxu0 %v429
        %505 = vmatpush.bf16.xpose.msra.mxu0 %v426
        %506 = vmatpush.bf16.xpose.msra.mxu0 %v423
        %507 = vmatpush.bf16.xpose.msra.mxu0 %v420
        %508 = vmatpush.bf16.xpose.msra.mxu0 %v417
        %509 = vmatpush.bf16.xpose.msra.mxu0 %v414
        %510 = vmatpush.bf16.xpose.msra.mxu0 %v411
        %511 = vmatpush.bf16.xpose.msra.mxu0 %v408
        %512 = vmatmul.bf16.gmra.mxu0 %v432
        %v513 = vpop.f32.mrf.mxu0
        %v514 = vadd.f32 0.0, %v513
        %v515 = vpop.f32.mrf.mxu0
        %v516 = vadd.f32 0.0, %v515
        %517 = vmatmul.bf16.gmra.mxu0 %v435
        %v518 = vpop.f32.mrf.mxu0
        %v519 = vadd.f32 0.0, %v518
        %v520 = vpop.f32.mrf.mxu0
        %v521 = vadd.f32 0.0, %v520
        %522 = vmatmul.bf16.gmra.mxu0 %v438
        %v523 = vpop.f32.mrf.mxu0
        %v524 = vadd.f32 0.0, %v523
        %v525 = vpop.f32.mrf.mxu0
        %v526 = vadd.f32 0.0, %v525
        %527 = vmatmul.bf16.gmra.mxu0 %v441
        %v528 = vpop.f32.mrf.mxu0
        %v529 = vadd.f32 0.0, %v528
        %v530 = vpop.f32.mrf.mxu0
        %v531 = vadd.f32 0.0, %v530
        %532 = vmatmul.bf16.gmra.mxu0 %v444
        %v533 = vpop.f32.mrf.mxu0
        %v534 = vadd.f32 0.0, %v533
        %v535 = vpop.f32.mrf.mxu0
        %v536 = vadd.f32 0.0, %v535
        %537 = vmatmul.bf16.gmra.mxu0 %v447
        %v538 = vpop.f32.mrf.mxu0
        %v539 = vadd.f32 0.0, %v538
        %v540 = vpop.f32.mrf.mxu0
        %v541 = vadd.f32 0.0, %v540
        %542 = vmatmul.bf16.gmra.mxu0 %v450
        %v543 = vpop.f32.mrf.mxu0
        %v544 = vadd.f32 0.0, %v543
        %v545 = vpop.f32.mrf.mxu0
        %v546 = vadd.f32 0.0, %v545
        %547 = vmatmul.bf16.gmra.mxu0 %v453
        %v548 = vpop.f32.mrf.mxu0
        %v549 = vadd.f32 0.0, %v548
        %v550 = vpop.f32.mrf.mxu0
        %v551 = vadd.f32 0.0, %v550
        %552 = vdwg.mxu0
        %v553 = vld [vmem:[%s288] sm:$0xff]
        %v554 = vld [vmem:[%s288 + $0x8] sm:$0xff]
        %v555 = vmul.f32 %v465, %v553
        %v556 = vmul.f32 %v467, %v554
        %v557 = vmul.f32 %v470, %v553
        %v558 = vmul.f32 %v472, %v554
        %v559 = vmul.f32 %v475, %v553
        %v560 = vmul.f32 %v477, %v554
        %v561 = vmul.f32 %v480, %v553
        %v562 = vmul.f32 %v482, %v554
        %v563 = vmul.f32 %v485, %v553
        %v564 = vmul.f32 %v487, %v554
        %v565 = vmul.f32 %v490, %v553
        %v566 = vmul.f32 %v492, %v554
        %v567 = vmul.f32 %v495, %v553
        %v568 = vmul.f32 %v497, %v554
        %v569 = vmul.f32 %v500, %v553
        %v570 = vmul.f32 %v502, %v554
        %v571 = vld [vmem:[%s293] sm:$0xff]
        %v572 = vld [vmem:[%s293 + $0x8] sm:$0xff]
        %v573 = vmul.f32 %v514, %v571
        %v574 = vmul.f32 %v516, %v572
        %v575 = vmul.f32 %v519, %v571
        %v576 = vmul.f32 %v521, %v572
        %v577 = vmul.f32 %v524, %v571
        %v578 = vmul.f32 %v526, %v572
        %v579 = vmul.f32 %v529, %v571
        %v580 = vmul.f32 %v531, %v572
        %v581 = vmul.f32 %v534, %v571
        %v582 = vmul.f32 %v536, %v572
        %v583 = vmul.f32 %v539, %v571
        %v584 = vmul.f32 %v541, %v572
        %v585 = vmul.f32 %v544, %v571
        %v586 = vmul.f32 %v546, %v572
        %v587 = vmul.f32 %v549, %v571
        %v588 = vmul.f32 %v551, %v572
        %v589 = vmax.f32 %v555, %v556
        %v590 = vrot.slane %v589, 4
        %v591 = vmax.f32 %v589, %v590
        %v592 = vrot.slane %v591, 2
        %v593 = vmax.f32 %v591, %v592
        %v594 = vrot.slane %v593, 1
        %v595 = vmax.f32 %v593, %v594
        %v596 = vmax.f32 %v557, %v558
        %v597 = vrot.slane %v596, 4
        %v598 = vmax.f32 %v596, %v597
        %v599 = vrot.slane %v598, 2
        %v600 = vmax.f32 %v598, %v599
        %v601 = vrot.slane %v600, 1
        %v602 = vmax.f32 %v600, %v601
        %v603 = vmax.f32 %v559, %v560
        %v604 = vrot.slane %v603, 4
        %v605 = vmax.f32 %v603, %v604
        %v606 = vrot.slane %v605, 2
        %v607 = vmax.f32 %v605, %v606
        %v608 = vrot.slane %v607, 1
        %v609 = vmax.f32 %v607, %v608
        %v610 = vmax.f32 %v561, %v562
        %v611 = vrot.slane %v610, 4
        %v612 = vmax.f32 %v610, %v611
        %v613 = vrot.slane %v612, 2
        %v614 = vmax.f32 %v612, %v613
        %v615 = vrot.slane %v614, 1
        %v616 = vmax.f32 %v614, %v615
        %v617 = vmax.f32 %v563, %v564
        %v618 = vrot.slane %v617, 4
        %v619 = vmax.f32 %v617, %v618
        %v620 = vrot.slane %v619, 2
        %v621 = vmax.f32 %v619, %v620
        %v622 = vrot.slane %v621, 1
        %v623 = vmax.f32 %v621, %v622
        %v624 = vmax.f32 %v565, %v566
        %v625 = vrot.slane %v624, 4
        %v626 = vmax.f32 %v624, %v625
        %v627 = vrot.slane %v626, 2
        %v628 = vmax.f32 %v626, %v627
        %v629 = vrot.slane %v628, 1
        %v630 = vmax.f32 %v628, %v629
        %v631 = vmax.f32 %v567, %v568
        %v632 = vrot.slane %v631, 4
        %v633 = vmax.f32 %v631, %v632
        %v634 = vrot.slane %v633, 2
        %v635 = vmax.f32 %v633, %v634
        %v636 = vrot.slane %v635, 1
        %v637 = vmax.f32 %v635, %v636
        %v638 = vmax.f32 %v569, %v570
        %v639 = vrot.slane %v638, 4
        %v640 = vmax.f32 %v638, %v639
        %v641 = vrot.slane %v640, 2
        %v642 = vmax.f32 %v640, %v641
        %v643 = vrot.slane %v642, 1
        %v644 = vmax.f32 %v642, %v643
        %v645 = vpack.c.bf16 %v595, %v595
        %v646 = vpack.c.bf16 %v602, %v602
        %v647 = vpack.c.bf16 %v609, %v609
        %v648 = vpack.c.bf16 %v616, %v616
        %v649 = vpack.c.bf16 %v623, %v623
        %v650 = vpack.c.bf16 %v630, %v630
        %v651 = vpack.c.bf16 %v637, %v637
        %v652 = vpack.c.bf16 %v644, %v644
        %v661 = vunpack.c.l.b16 %v645
        %v662 = vunpack.c.l.b16 %v646
        %v663 = vunpack.c.l.b16 %v647
        %v664 = vunpack.c.l.b16 %v648
        %v665 = vunpack.c.l.b16 %v649
        %v666 = vunpack.c.l.b16 %v650
        %v667 = vunpack.c.l.b16 %v651
        %v668 = vunpack.c.l.b16 %v652
        %vm669 = vcmask 1041409
        %v670 = vsel %vm669, %v662, %v661
        %vm671 = vcmask 1042434
        %v672 = vsel %vm671, %v663, %v670
        %vm673 = vcmask 1043459
        %v674 = vsel %vm673, %v664, %v672
        %vm675 = vcmask 1044484
        %v676 = vsel %vm675, %v665, %v674
        %vm677 = vcmask 1045509
        %v678 = vsel %vm677, %v666, %v676
        %vm679 = vcmask 1046534
        %v680 = vsel %vm679, %v667, %v678
        %vm681 = vcmask 1047559
        %v682 = vsel %vm681, %v668, %v680
        %v683 = vpack.c.b16 %v682, %v682
        %685 = vst [vmem:[%s273] sm:$0xf] %v683
        %v686 = vmax.f32 %v573, %v574
        %v687 = vrot.slane %v686, 4
        %v688 = vmax.f32 %v686, %v687
        %v689 = vrot.slane %v688, 2
        %v690 = vmax.f32 %v688, %v689
        %v691 = vrot.slane %v690, 1
        %v692 = vmax.f32 %v690, %v691
        %v693 = vmax.f32 %v575, %v576
        %v694 = vrot.slane %v693, 4
        %v695 = vmax.f32 %v693, %v694
        %v696 = vrot.slane %v695, 2
        %v697 = vmax.f32 %v695, %v696
        %v698 = vrot.slane %v697, 1
        %v699 = vmax.f32 %v697, %v698
        %v700 = vmax.f32 %v577, %v578
        %v701 = vrot.slane %v700, 4
        %v702 = vmax.f32 %v700, %v701
        %v703 = vrot.slane %v702, 2
        %v704 = vmax.f32 %v702, %v703
        %v705 = vrot.slane %v704, 1
        %v706 = vmax.f32 %v704, %v705
        %v707 = vmax.f32 %v579, %v580
        %v708 = vrot.slane %v707, 4
        %v709 = vmax.f32 %v707, %v708
        %v710 = vrot.slane %v709, 2
        %v711 = vmax.f32 %v709, %v710
        %v712 = vrot.slane %v711, 1
        %v713 = vmax.f32 %v711, %v712
        %v714 = vmax.f32 %v581, %v582
        %v715 = vrot.slane %v714, 4
        %v716 = vmax.f32 %v714, %v715
        %v717 = vrot.slane %v716, 2
        %v718 = vmax.f32 %v716, %v717
        %v719 = vrot.slane %v718, 1
        %v720 = vmax.f32 %v718, %v719
        %v721 = vmax.f32 %v583, %v584
        %v722 = vrot.slane %v721, 4
        %v723 = vmax.f32 %v721, %v722
        %v724 = vrot.slane %v723, 2
        %v725 = vmax.f32 %v723, %v724
        %v726 = vrot.slane %v725, 1
        %v727 = vmax.f32 %v725, %v726
        %v728 = vmax.f32 %v585, %v586
        %v729 = vrot.slane %v728, 4
        %v730 = vmax.f32 %v728, %v729
        %v731 = vrot.slane %v730, 2
        %v732 = vmax.f32 %v730, %v731
        %v733 = vrot.slane %v732, 1
        %v734 = vmax.f32 %v732, %v733
        %v735 = vmax.f32 %v587, %v588
        %v736 = vrot.slane %v735, 4
        %v737 = vmax.f32 %v735, %v736
        %v738 = vrot.slane %v737, 2
        %v739 = vmax.f32 %v737, %v738
        %v740 = vrot.slane %v739, 1
        %v741 = vmax.f32 %v739, %v740
        %v742 = vpack.c.bf16 %v692, %v692
        %v743 = vpack.c.bf16 %v699, %v699
        %v744 = vpack.c.bf16 %v706, %v706
        %v745 = vpack.c.bf16 %v713, %v713
        %v746 = vpack.c.bf16 %v720, %v720
        %v747 = vpack.c.bf16 %v727, %v727
        %v748 = vpack.c.bf16 %v734, %v734
        %v749 = vpack.c.bf16 %v741, %v741
        %v758 = vunpack.c.l.b16 %v742
        %v759 = vunpack.c.l.b16 %v743
        %v760 = vunpack.c.l.b16 %v744
        %v761 = vunpack.c.l.b16 %v745
        %v762 = vunpack.c.l.b16 %v746
        %v763 = vunpack.c.l.b16 %v747
        %v764 = vunpack.c.l.b16 %v748
        %v765 = vunpack.c.l.b16 %v749
        %v766 = vsel %vm669, %v759, %v758
        %v767 = vsel %vm671, %v760, %v766
        %v768 = vsel %vm673, %v761, %v767
        %v769 = vsel %vm675, %v762, %v768
        %v770 = vsel %vm677, %v763, %v769
        %v771 = vsel %vm679, %v764, %v770
        %v772 = vsel %vm681, %v765, %v771
        %v773 = vpack.c.b16 %v772, %v772
        %775 = vst [vmem:[%s266] sm:$0xf] %v773
        %s776 = sand.u32 %s135, 1
        %s777 = scalar_lea.sflag [#allocation3], %s776
        %s778 = sand.u32 %s135, 1
        %s779 = smul.addr %s778, 4
        %s780 = scalar_lea.vmem [#allocation2], %s779
        %s781 = sand.u32 %s161, 1
        %s782 = scalar_lea.sflag [#allocation5], %s781
        %s783 = sand.u32 %s161, 1
        %s784 = smul.addr %s783, 4
        %s785 = scalar_lea.vmem [#allocation4], %s784
        // Predicated region
        $region37: #{tpu_custom_call.1} parent=35 // pred_check
          %p786 = pneg %p145
        $region38: #{tpu_custom_call.1} parent=35 // pred_check_branch
          %788 = sbr.rel (%p786) target = $region40
        $region39: #{tpu_custom_call.1} parent=35 // pred_region
          %790 = vsyncadd %s777, 0
          %s791 = smul.addr %s23, 4
          %s792 = scalar_lea.hbm %s4, %s791
          %s794 = sshll.u32 %s780, 4
          %s795 = int_to_ptr.vmem [resolvable:$true] %s794
          %s796 = sshll.u32 %s792, 4
          %s797 = int_to_ptr.hbm [resolvable:$true] %s796
          %799 = dma.vmem_to_hbm [thread:$0]  %s795, 64, %s797, %s777
        $region40: #{tpu_custom_call.1} parent=35 // pred_fallthru
          _
        // Predicated region
        $region41: #{tpu_custom_call.1} parent=35 // pred_check
          %p800 = pneg %p171
        $region42: #{tpu_custom_call.1} parent=35 // pred_check_branch
          %802 = sbr.rel (%p800) target = $region44
        $region43: #{tpu_custom_call.1} parent=35 // pred_region
          %804 = vsyncadd %s782, 0
          %s805 = smul.addr %s23, 4
          %s806 = scalar_lea.hbm %s5, %s805
          %s808 = sshll.u32 %s785, 4
          %s809 = int_to_ptr.vmem [resolvable:$true] %s808
          %s810 = sshll.u32 %s806, 4
          %s811 = int_to_ptr.hbm [resolvable:$true] %s810
          %813 = dma.vmem_to_hbm [thread:$0]  %s809, 64, %s811, %s782
        $region44: #{tpu_custom_call.1} parent=35 // pred_fallthru
          _
      $region36: #{tpu_custom_call.1} parent=5 // pred_fallthru
        _
      %p814 = scmp.le.s32.totalorder 2, %s18
      // Predicated region
      $region45: #{tpu_custom_call.1} parent=5 // pred_check
        %p815 = pneg %p814
      $region46: #{tpu_custom_call.1} parent=5 // pred_check_branch
        %817 = sbr.rel (%p815) target = $region48
      $region47: #{tpu_custom_call.1} parent=5 // pred_region
        %s818 = ssub.s32 %s18, 2
        // Predicated region
        $region49: #{tpu_custom_call.1} parent=47 // pred_check
          %p819 = pneg %p151
        $region50: #{tpu_custom_call.1} parent=47 // pred_check_branch
          %821 = sbr.rel (%p819) target = $region52
        $region51: #{tpu_custom_call.1} parent=47 // pred_region
          %s822 = sand.u32 %s136, 1
          %s823 = scalar_lea.sflag [#allocation3], %s822
          %s824 = sand.u32 %s136, 1
          %s825 = smul.addr %s824, 4
          %s826 = scalar_lea.vmem [#allocation2], %s825
          %828 = dma.done %s823, 64
        $region52: #{tpu_custom_call.1} parent=47 // pred_fallthru
          _
        // Predicated region
        $region53: #{tpu_custom_call.1} parent=47 // pred_check
          %p829 = pneg %p177
        $region54: #{tpu_custom_call.1} parent=47 // pred_check_branch
          %831 = sbr.rel (%p829) target = $region56
        $region55: #{tpu_custom_call.1} parent=47 // pred_region
          %s832 = sand.u32 %s162, 1
          %s833 = scalar_lea.sflag [#allocation5], %s832
          %s834 = sand.u32 %s162, 1
          %s835 = smul.addr %s834, 4
          %s836 = scalar_lea.vmem [#allocation4], %s835
          %838 = dma.done %s833, 64
        $region56: #{tpu_custom_call.1} parent=47 // pred_fallthru
          _
      $region48: #{tpu_custom_call.1} parent=5 // pred_fallthru
        _
    $region6: #{tpu_custom_call.1} parent=1 // loop_footer
      %s22 = sadd.s32 1, %s18
    $region7: #{tpu_custom_call.1} parent=1 // loop_footer_branch
      %17 = sbr.rel target = $region3
    $region8: #{tpu_custom_call.1} parent=1 // loop_exit
      _
    %839 = vsyncpa [#allocation3], 1
    %s840 = scalar_lea.sflag [#allocation3], 1
    %841 = vsyncpa %s840, 1
    %842 = vsyncpa [#allocation5], 1
    %s843 = scalar_lea.sflag [#allocation5], 1
    %844 = vsyncpa %s843, 1

</llo_original>
